<compile_context>
chip_gen: v6e
topology: v6e:2x2x1
jax: 0.10.0
libtpu: 0.0.40
codegen_flags: <defaults>
</compile_context>

<pallas_src>
import functools

import jax
import jax.numpy as jnp
from jax.experimental import pallas as pl
from jax.experimental.pallas import tpu as pltpu


def _conv_gn_mish_kernel(x_ref, w_ref, b_ref, gamma_ref, beta_ref, avg_ref,
                         o_ref, patch_ref, *, K, L, Cin, Cout, eps):
    """One grid step = one batch element (channels on sublanes, L on lanes).

    x_ref:     (1, Cin, L + K - 1)   length-padded input, NCL
    w_ref:     (Cout, K * Cin)       im2col-flattened conv weight
    b_ref:     (Cout, 1)             conv bias (column -> broadcasts over lanes)
    gamma_ref: (Cout, 1)             GroupNorm scale
    beta_ref:  (Cout, 1)             GroupNorm shift
    avg_ref:   (Cout, Cout)          group-averaging matrix (1/(cpg*L) within group)
    o_ref:     (1, Cout, L)          output, NCL
    patch_ref: (K * Cin, L)          VMEM scratch for the im2col patch
    """
    x = x_ref[0].astype(jnp.float32)                          # (Cin, L+K-1)

    # ---- Build the im2col patch once: patch[k*Cin + ci, t] = x_pad[ci, t + k]
    for k in range(K):                                        # static unroll, tiny K
        patch_ref[k * Cin:(k + 1) * Cin, :] = x[:, k:k + L]

    # ---- Conv1d: single fused MXU dot, contraction = K*Cin ----
    acc = jnp.dot(w_ref[...].astype(jnp.float32), patch_ref[...],
                  preferred_element_type=jnp.float32)         # (Cout, L)
    acc = acc + b_ref[...].astype(jnp.float32)                # lane broadcast

    # ---- GroupNorm: lane reduce + group-averaging matmul (reduce + broadcast) ----
    sum_c = jnp.sum(acc, axis=1, keepdims=True)               # (Cout, 1)
    sumsq_c = jnp.sum(acc * acc, axis=1, keepdims=True)       # (Cout, 1)
    avg = avg_ref[...].astype(jnp.float32)                    # (Cout, Cout)
    mean_c = jnp.dot(avg, sum_c, preferred_element_type=jnp.float32)
    meansq_c = jnp.dot(avg, sumsq_c, preferred_element_type=jnp.float32)
    var_c = meansq_c - mean_c * mean_c
    inv_c = jax.lax.rsqrt(var_c + eps)
    scale_c = gamma_ref[...].astype(jnp.float32) * inv_c      # (Cout, 1)
    shift_c = beta_ref[...].astype(jnp.float32) - mean_c * scale_c
    y = acc * scale_c + shift_c                               # (Cout, L)

    # ---- Mish via single-exp identity: x * tanh(softplus(x)) == x*u/(u+2) ----
    t = jnp.exp(jnp.minimum(y, 20.0))                         # clamp avoids overflow
    u = t * (t + 2.0)
    d = u + 2.0
    r = pl.reciprocal(d, approx=True)
    r = r * (2.0 - d * r)                                     # one Newton step -> f32 accuracy
    y = y * u * r

    o_ref[...] = y[None].astype(o_ref.dtype)


def conv1d_block(x_ncl, weight, bias, gamma, beta, *, n_groups=8, eps=1e-5):
    """x_ncl: (B, Cin, L); weight: (Cout, Cin, K); bias/gamma/beta: (Cout,).

    Returns (B, Cout, L), matching PyTorch Conv1dBlock (odd kernel_size, mish=True)."""
    B, Cin, L = x_ncl.shape
    Cout, Cin_w, K = weight.shape
    assert Cin_w == Cin, "weight Cin mismatch"
    assert K % 2 == 1, "padding=K//2 preserves length only for odd K"
    assert Cout % n_groups == 0, "GroupNorm requires Cout divisible by n_groups"
    pad = K // 2
    Lp = L + 2 * pad

    # Halo pad along the lane (length) axis only -- no layout transposes.
    x_pad = jnp.pad(x_ncl, ((0, 0), (0, 0), (pad, pad)))      # (B, Cin, Lp)

    # im2col-flattened weight: w_mat[co, k*Cin + ci] = weight[co, ci, k]
    w_mat = jnp.transpose(weight, (0, 2, 1)).reshape(Cout, K * Cin)
    b_col = bias.reshape(Cout, 1)
    g_col = gamma.reshape(Cout, 1)
    be_col = beta.reshape(Cout, 1)

    # Group-averaging matrix: avg[c, c'] = 1/(cpg*L) if c, c' share a group else 0.
    cpg = Cout // n_groups
    gidx = jnp.arange(Cout) // cpg
    avg_mat = (gidx[:, None] == gidx[None, :]).astype(jnp.float32) / float(cpg * L)

    kernel = functools.partial(
        _conv_gn_mish_kernel, K=K, L=L, Cin=Cin, Cout=Cout, eps=eps)

    out = pl.pallas_call(
        kernel,
        out_shape=jax.ShapeDtypeStruct((B, Cout, L), x_ncl.dtype),
        grid_spec=pltpu.PrefetchScalarGridSpec(
            num_scalar_prefetch=0,
            grid=(B,),
            in_specs=[
                pl.BlockSpec((1, Cin, Lp), lambda b: (b, 0, 0)),
                pl.BlockSpec((Cout, K * Cin), lambda b: (0, 0)),
                pl.BlockSpec((Cout, 1), lambda b: (0, 0)),
                pl.BlockSpec((Cout, 1), lambda b: (0, 0)),
                pl.BlockSpec((Cout, 1), lambda b: (0, 0)),
                pl.BlockSpec((Cout, Cout), lambda b: (0, 0)),
            ],
            out_specs=pl.BlockSpec((1, Cout, L), lambda b: (b, 0, 0)),
            scratch_shapes=[pltpu.VMEM((K * Cin, L), jnp.float32)],
        ),
        compiler_params=pltpu.CompilerParams(
            dimension_semantics=("parallel",)),
    )(x_pad, w_mat, b_col, g_col, be_col, avg_mat)

    return out                                                # already (B, Cout, L)


if __name__ == "__main__":
    # Small shapes consistent with the module: Conv1dBlock(4, 16, 3, n_groups=8)
    B, Cin, Cout, K, L, G = 2, 4, 16, 3, 16, 8

    key = jax.random.PRNGKey(0)
    kx, kw, kb, kg, kbe = jax.random.split(key, 5)

    x = jax.random.normal(kx, (B, Cin, L), dtype=jnp.float32)
    # Deterministic synthetic parameters (shapes from nn.Conv1d / nn.GroupNorm)
    weight = jax.random.normal(kw, (Cout, Cin, K), dtype=jnp.float32) * 0.1
    bias = jax.random.normal(kb, (Cout,), dtype=jnp.float32) * 0.1
    gamma = 1.0 + 0.1 * jax.random.normal(kg, (Cout,), dtype=jnp.float32)
    beta = 0.1 * jax.random.normal(kbe, (Cout,), dtype=jnp.float32)

    out = conv1d_block(x, weight, bias, gamma, beta, n_groups=G)
    jax.block_until_ready(out)

    # Pure-JAX reference (conv1d + groupnorm + mish)
    ref = jax.lax.conv_general_dilated(
        x, weight, window_strides=(1,), padding=[(K // 2, K // 2)],
        dimension_numbers=("NCH", "OIH", "NCH"))
    ref = ref + bias[None, :, None]
    r = ref.reshape(B, G, Cout // G, L)
    mu = r.mean(axis=(2, 3), keepdims=True)
    va = ((r - mu) ** 2).mean(axis=(2, 3), keepdims=True)
    r = (r - mu) / jnp.sqrt(va + 1e-5)
    ref = r.reshape(B, Cout, L) * gamma[None, :, None] + beta[None, :, None]
    ref = ref * jnp.tanh(jax.nn.softplus(ref))

    assert out.shape == (B, Cout, L)
    assert jnp.allclose(out, ref, atol=1e-4, rtol=1e-4), \
        f"max err {jnp.max(jnp.abs(out - ref))}"
    print("KERNEL_OK")
</pallas_src>

<mosaic_0001>
module attributes {stable_mosaic.version = 11 : i64} {
  func.func @_conv_gn_mish_kernel(%arg0: i32, %arg1: memref<1x4x18xf32, #tpu.memory_space<vmem>>, %arg2: memref<16x12xf32, #tpu.memory_space<vmem>>, %arg3: memref<16x1xf32, #tpu.memory_space<vmem>>, %arg4: memref<16x1xf32, #tpu.memory_space<vmem>>, %arg5: memref<16x1xf32, #tpu.memory_space<vmem>>, %arg6: memref<16x16xf32, #tpu.memory_space<vmem>>, %arg7: memref<1x16x16xf32, #tpu.memory_space<vmem>>, %arg8: memref<12x16xf32, #tpu.memory_space<vmem>>) attributes {dimension_semantics = [#tpu.dimension_semantics<parallel>], iteration_bounds = array<i64: 2>, scalar_prefetch = 0 : i64, scratch_operands = 1 : i64, tpu.core_type = #tpu.core_type<tc>, window_params = [{transform_indices = @transform_0, window_bounds = array<i64: 1, 4, 18>}, {pipeline_mode = #tpu.pipeline_mode<synchronous>, transform_indices = @transform_1, window_bounds = array<i64: 16, 12>}, {pipeline_mode = #tpu.pipeline_mode<synchronous>, transform_indices = @transform_2, window_bounds = array<i64: 16, 1>}, {pipeline_mode = #tpu.pipeline_mode<synchronous>, transform_indices = @transform_3, window_bounds = array<i64: 16, 1>}, {pipeline_mode = #tpu.pipeline_mode<synchronous>, transform_indices = @transform_4, window_bounds = array<i64: 16, 1>}, {pipeline_mode = #tpu.pipeline_mode<synchronous>, transform_indices = @transform_5, window_bounds = array<i64: 16, 16>}, {transform_indices = @transform_6, window_bounds = array<i64: 1, 16, 16>}]} {
    %c0 = arith.constant 0 : index
    %c0_0 = arith.constant 0 : index
    %c0_1 = arith.constant 0 : index
    %0 = vector.load %arg1[%c0, %c0_0, %c0_1] : memref<1x4x18xf32, #tpu.memory_space<vmem>>, vector<1x4x18xf32>
    %1 = vector.shape_cast %0 : vector<1x4x18xf32> to vector<4x18xf32>
    %2 = vector.extract_strided_slice %1 {offsets = [0, 0], sizes = [4, 16], strides = [1, 1]} : vector<4x18xf32> to vector<4x16xf32>
    %c0_2 = arith.constant 0 : index
    %c0_3 = arith.constant 0 : index
    %3 = vector.load %arg8[%c0_2, %c0_3] : memref<12x16xf32, #tpu.memory_space<vmem>>, vector<4x16xf32>
    tpu.vector_store %arg8[%c0_2, %c0_3], %2 {strides = array<i32>} : memref<12x16xf32, #tpu.memory_space<vmem>>, vector<4x16xf32>,
    %4 = vector.extract_strided_slice %1 {offsets = [0, 1], sizes = [4, 16], strides = [1, 1]} : vector<4x18xf32> to vector<4x16xf32>
    %c4 = arith.constant 4 : index
    %c0_4 = arith.constant 0 : index
    %5 = vector.load %arg8[%c4, %c0_4] : memref<12x16xf32, #tpu.memory_space<vmem>>, vector<4x16xf32>
    tpu.vector_store %arg8[%c4, %c0_4], %4 {strides = array<i32>} : memref<12x16xf32, #tpu.memory_space<vmem>>, vector<4x16xf32>,
    %6 = vector.extract_strided_slice %1 {offsets = [0, 2], sizes = [4, 16], strides = [1, 1]} : vector<4x18xf32> to vector<4x16xf32>
    %c8 = arith.constant 8 : index
    %c0_5 = arith.constant 0 : index
    %7 = vector.load %arg8[%c8, %c0_5] : memref<12x16xf32, #tpu.memory_space<vmem>>, vector<4x16xf32>
    tpu.vector_store %arg8[%c8, %c0_5], %6 {strides = array<i32>} : memref<12x16xf32, #tpu.memory_space<vmem>>, vector<4x16xf32>,
    %c0_6 = arith.constant 0 : index
    %c0_7 = arith.constant 0 : index
    %8 = vector.load %arg2[%c0_6, %c0_7] : memref<16x12xf32, #tpu.memory_space<vmem>>, vector<16x12xf32>
    %c0_8 = arith.constant 0 : index
    %c0_9 = arith.constant 0 : index
    %9 = vector.load %arg8[%c0_8, %c0_9] : memref<12x16xf32, #tpu.memory_space<vmem>>, vector<12x16xf32>
    %cst = arith.constant dense<0.000000e+00> : vector<16x16xf32>
    %10 = tpu.matmul %8, %9, %cst {dimension_numbers = #tpu.dot_dimension_numbers<[1], [0], [0], [1], [0, 0, 1, 1], [], []>} : vector<16x12xf32>, vector<12x16xf32>, vector<16x16xf32> -> vector<16x16xf32>
    %c0_10 = arith.constant 0 : index
    %c0_11 = arith.constant 0 : index
    %11 = vector.load %arg3[%c0_10, %c0_11] : memref<16x1xf32, #tpu.memory_space<vmem>>, vector<16x1xf32>
    %12 = vector.broadcast %11 : vector<16x1xf32> to vector<16x16xf32>
    %13 = arith.addf %10, %12 : vector<16x16xf32>
    %cst_12 = arith.constant dense<0.000000e+00> : vector<16xf32>
    %14 = vector.multi_reduction <add>, %13, %cst_12 [1] : vector<16x16xf32> to vector<16xf32>
    %15 = vector.shape_cast %14 : vector<16xf32> to vector<16x1xf32>
    %16 = arith.mulf %13, %13 : vector<16x16xf32>
    %cst_13 = arith.constant dense<0.000000e+00> : vector<16xf32>
    %17 = vector.multi_reduction <add>, %16, %cst_13 [1] : vector<16x16xf32> to vector<16xf32>
    %18 = vector.shape_cast %17 : vector<16xf32> to vector<16x1xf32>
    %c0_14 = arith.constant 0 : index
    %c0_15 = arith.constant 0 : index
    %19 = vector.load %arg6[%c0_14, %c0_15] : memref<16x16xf32, #tpu.memory_space<vmem>>, vector<16x16xf32>
    %cst_16 = arith.constant dense<0.000000e+00> : vector<16x1xf32>
    %20 = tpu.matmul %19, %15, %cst_16 {dimension_numbers = #tpu.dot_dimension_numbers<[1], [0], [0], [1], [0, 0, 1, 1], [], []>} : vector<16x16xf32>, vector<16x1xf32>, vector<16x1xf32> -> vector<16x1xf32>
    %cst_17 = arith.constant dense<0.000000e+00> : vector<16x1xf32>
    %21 = tpu.matmul %19, %18, %cst_17 {dimension_numbers = #tpu.dot_dimension_numbers<[1], [0], [0], [1], [0, 0, 1, 1], [], []>} : vector<16x16xf32>, vector<16x1xf32>, vector<16x1xf32> -> vector<16x1xf32>
    %22 = arith.mulf %20, %20 : vector<16x1xf32>
    %23 = arith.subf %21, %22 : vector<16x1xf32>
    %cst_18 = arith.constant 9.99999974E-6 : f32
    %24 = vector.broadcast %cst_18 : f32 to vector<16x1xf32>
    %25 = arith.addf %23, %24 : vector<16x1xf32>
    %26 = math.rsqrt %25 : vector<16x1xf32>
    %c0_19 = arith.constant 0 : index
    %c0_20 = arith.constant 0 : index
    %27 = vector.load %arg4[%c0_19, %c0_20] : memref<16x1xf32, #tpu.memory_space<vmem>>, vector<16x1xf32>
    %28 = arith.mulf %27, %26 : vector<16x1xf32>
    %c0_21 = arith.constant 0 : index
    %c0_22 = arith.constant 0 : index
    %29 = vector.load %arg5[%c0_21, %c0_22] : memref<16x1xf32, #tpu.memory_space<vmem>>, vector<16x1xf32>
    %30 = arith.mulf %20, %28 : vector<16x1xf32>
    %31 = arith.subf %29, %30 : vector<16x1xf32>
    %32 = vector.broadcast %28 : vector<16x1xf32> to vector<16x16xf32>
    %33 = arith.mulf %13, %32 : vector<16x16xf32>
    %34 = vector.broadcast %31 : vector<16x1xf32> to vector<16x16xf32>
    %35 = arith.addf %33, %34 : vector<16x16xf32>
    %cst_23 = arith.constant 2.000000e+01 : f32
    %36 = vector.broadcast %cst_23 : f32 to vector<16x16xf32>
    %37 = arith.minimumf %35, %36 : vector<16x16xf32>
    %38 = math.exp %37 : vector<16x16xf32>
    %cst_24 = arith.constant 2.000000e+00 : f32
    %39 = vector.broadcast %cst_24 : f32 to vector<16x16xf32>
    %40 = arith.addf %38, %39 : vector<16x16xf32>
    %41 = arith.mulf %38, %40 : vector<16x16xf32>
    %cst_25 = arith.constant 2.000000e+00 : f32
    %42 = vector.broadcast %cst_25 : f32 to vector<16x16xf32>
    %43 = arith.addf %41, %42 : vector<16x16xf32>
    %44 = tpu.reciprocal %43 {approx = true} : vector<16x16xf32> -> vector<16x16xf32>
    %45 = arith.mulf %43, %44 : vector<16x16xf32>
    %cst_26 = arith.constant 2.000000e+00 : f32
    %46 = vector.broadcast %cst_26 : f32 to vector<16x16xf32>
    %47 = arith.subf %46, %45 : vector<16x16xf32>
    %48 = arith.mulf %44, %47 : vector<16x16xf32>
    %49 = arith.mulf %35, %41 : vector<16x16xf32>
    %50 = arith.mulf %49, %48 : vector<16x16xf32>
    %51 = vector.shape_cast %50 : vector<16x16xf32> to vector<1x16x16xf32>
    %c0_27 = arith.constant 0 : index
    %c0_28 = arith.constant 0 : index
    %c0_29 = arith.constant 0 : index
    %52 = vector.load %arg7[%c0_27, %c0_28, %c0_29] : memref<1x16x16xf32, #tpu.memory_space<vmem>>, vector<1x16x16xf32>
    tpu.vector_store %arg7[%c0_27, %c0_28, %c0_29], %51 {strides = array<i32>} : memref<1x16x16xf32, #tpu.memory_space<vmem>>, vector<1x16x16xf32>,
    return
  }
  func.func @transform_0(%arg0: i32) -> (i32, i32, i32) {
    %c0_i32 = arith.constant 0 : i32
    %c0_i32_0 = arith.constant 0 : i32
    %c0_i32_1 = arith.constant 0 : i32
    return %arg0, %c0_i32, %c0_i32_0 : i32, i32, i32
  }
  func.func @transform_1(%arg0: i32) -> (i32, i32) {
    %c0_i32 = arith.constant 0 : i32
    %c0_i32_0 = arith.constant 0 : i32
    %c0_i32_1 = arith.constant 0 : i32
    return %c0_i32, %c0_i32_0 : i32, i32
  }
  func.func @transform_2(%arg0: i32) -> (i32, i32) {
    %c0_i32 = arith.constant 0 : i32
    %c0_i32_0 = arith.constant 0 : i32
    %c0_i32_1 = arith.constant 0 : i32
    return %c0_i32, %c0_i32_0 : i32, i32
  }
  func.func @transform_3(%arg0: i32) -> (i32, i32) {
    %c0_i32 = arith.constant 0 : i32
    %c0_i32_0 = arith.constant 0 : i32
    %c0_i32_1 = arith.constant 0 : i32
    return %c0_i32, %c0_i32_0 : i32, i32
  }
  func.func @transform_4(%arg0: i32) -> (i32, i32) {
    %c0_i32 = arith.constant 0 : i32
    %c0_i32_0 = arith.constant 0 : i32
    %c0_i32_1 = arith.constant 0 : i32
    return %c0_i32, %c0_i32_0 : i32, i32
  }
  func.func @transform_5(%arg0: i32) -> (i32, i32) {
    %c0_i32 = arith.constant 0 : i32
    %c0_i32_0 = arith.constant 0 : i32
    %c0_i32_1 = arith.constant 0 : i32
    return %c0_i32, %c0_i32_0 : i32, i32
  }
  func.func @transform_6(%arg0: i32) -> (i32, i32, i32) {
    %c0_i32 = arith.constant 0 : i32
    %c0_i32_0 = arith.constant 0 : i32
    %c0_i32_1 = arith.constant 0 : i32
    return %arg0, %c0_i32, %c0_i32_0 : i32, i32, i32
  }
}

</mosaic_0001>

<llo_original>
// kernel: tpu_custom_call.1
$region0: #{tpu_custom_call.1}
  #allocation0 [shape = 'u32[]', space=smem, size = 0x4, offset = 0x4, fixed_abs, tag = 'smem constant byte address 0x4 - core index']
  #allocation1 [shape = 'u32[144,128]{1,0:T(1,128)}', space=vmem, size = 0x12000, scoped, tag = 'internal scratch']
  #allocation2 [shape = 'f32[12,16]{1,0:T(8,128)}', space=vmem, size = 0x2000, scoped, tag = 'scratch operand']
  %s0 = inlined_call_operand.vmem [shape: f32[2,4,18], index: 0, kind: input, shape index: {}]
  %s1 = inlined_call_operand.vmem [shape: f32[16,12], index: 1, kind: input, shape index: {}]
  %s2 = inlined_call_operand.vmem [shape: f32[16,1], index: 2, kind: input, shape index: {}]
  %s3 = inlined_call_operand.vmem [shape: f32[16,1], index: 3, kind: input, shape index: {}]
  %s4 = inlined_call_operand.vmem [shape: f32[16,1], index: 4, kind: input, shape index: {}]
  %s5 = inlined_call_operand.vmem [shape: f32[16,16], index: 5, kind: input, shape index: {}]
  %s6 = inlined_call_operand.hbm [shape: f32[2,16,16], index: 6, kind: output, shape index: {}]
  %s7 = sld [smem:[#allocation0]]
  $region57: #{tpu_custom_call.1} parent=0
    _
  %s9 = ssub.s32 1, %s7
  %s10 = scalar_select 0, %s9, %s7
  $region1: #{tpu_custom_call.1} parent=0
    #allocation3 [shape = 'u8[16384]{0}', space=vmem, size = 0x4000, scoped, tag = 'output window, operand 0']
    #allocation4 [shape = 's32[2]{0}', space=sflag, size = 0x8, scoped, tag = 'scoped memory for tpu_custom_call.1']
    %11 = vsyncpa [#allocation4], 0
    %s12 = scalar_lea.sflag [#allocation4], 1
    %13 = vsyncpa %s12, 0
    loop: start=0, step=1, limit=4
    $region2: #{tpu_custom_call.1} parent=1 // loop_pre_header
      _
    $region3: #{tpu_custom_call.1} parent=1 // loop_header
      %s15 = sphi 0, %s19
      %p16 = scmp.ge.s32.totalorder %s15, 4
      %s25 = sphi 0, %s27
      %s28 = sphi 0, %s25
      %s29 = sphi 0, %s28
      %s45 = sphi 0, %s29
      %s49 = sphi 0, %s49
      %s51 = sphi 0, %s49
      %s52 = sphi 0, %s51
      %s66 = sphi 0, %s52
      %s70 = sphi 0, %s70
      %s72 = sphi 0, %s70
      %s73 = sphi 0, %s72
      %s87 = sphi 0, %s73
      %s91 = sphi 0, %s91
      %s93 = sphi 0, %s91
      %s94 = sphi 0, %s93
      %s108 = sphi 0, %s94
      %s112 = sphi 0, %s112
      %s114 = sphi 0, %s112
      %s115 = sphi 0, %s114
      %s129 = sphi 0, %s115
      %s133 = sphi 0, %s133
      %s135 = sphi 0, %s133
      %s136 = sphi 0, %s135
      %s150 = sphi 0, %s136
      %s156 = sphi 0, %s158
      %s159 = sphi 0, %s156
      %s160 = sphi 0, %s159
      %s176 = sphi 0, %s160
    $region4: #{tpu_custom_call.1} parent=1 // loop_header_branch
      %18 = sbr.rel (%p16) target = $region8
    $region5: #{tpu_custom_call.1} parent=1 // loop_body
      %s20 = ssub.s32 %s15, 1
      %s21 = ssub.s32 %s15, 2
      %s22 = sadd.s32 %s15, 1
      %s23 = ssub.s32 %s15, %s22
      %p24 = scmp.eq.s32.totalorder %s23, 0
      %s26 = sadd.s32 %s25, 1
      %s27 = scalar_select %p24, %s25, %s26
      %p30 = pneg %p24
      %p31 = scmp.eq.s32.totalorder %s15, 1
      %p32 = por %p30, %p31
      %p33 = scmp.ne.s32.totalorder %s25, %s28
      %p34 = scmp.eq.s32.totalorder %s15, 0
      %p35 = por %p33, %p34
      %p36 = scmp.ne.s32.totalorder %s25, %s28
      %p37 = scmp.eq.s32.totalorder %s20, 1
      %p38 = por %p36, %p37
      %p39 = scmp.ne.s32.totalorder %s28, %s29
      %p40 = scmp.eq.s32.totalorder %s20, 0
      %p41 = por %p39, %p40
      %p42 = scmp.ne.s32.totalorder %s28, %s29
      %p43 = scmp.eq.s32.totalorder %s21, 1
      %p44 = por %p42, %p43
      %p46 = scmp.ne.s32.totalorder %s29, %s45
      %p47 = scmp.eq.s32.totalorder %s21, 0
      %p48 = por %p46, %p47
      %s50 = sadd.s32 %s49, 1
      %p53 = scmp.eq.s32.totalorder %s15, 1
      %p54 = scmp.ne.s32.totalorder %s49, %s51
      %p55 = scmp.eq.s32.totalorder %s15, 0
      %p56 = por %p54, %p55
      %p57 = scmp.ne.s32.totalorder %s49, %s51
      %p58 = scmp.eq.s32.totalorder %s20, 1
      %p59 = por %p57, %p58
      %p60 = scmp.ne.s32.totalorder %s51, %s52
      %p61 = scmp.eq.s32.totalorder %s20, 0
      %p62 = por %p60, %p61
      %p63 = scmp.ne.s32.totalorder %s51, %s52
      %p64 = scmp.eq.s32.totalorder %s21, 1
      %p65 = por %p63, %p64
      %p67 = scmp.ne.s32.totalorder %s52, %s66
      %p68 = scmp.eq.s32.totalorder %s21, 0
      %p69 = por %p67, %p68
      %s71 = sadd.s32 %s70, 1
      %p74 = scmp.eq.s32.totalorder %s15, 1
      %p75 = scmp.ne.s32.totalorder %s70, %s72
      %p76 = scmp.eq.s32.totalorder %s15, 0
      %p77 = por %p75, %p76
      %p78 = scmp.ne.s32.totalorder %s70, %s72
      %p79 = scmp.eq.s32.totalorder %s20, 1
      %p80 = por %p78, %p79
      %p81 = scmp.ne.s32.totalorder %s72, %s73
      %p82 = scmp.eq.s32.totalorder %s20, 0
      %p83 = por %p81, %p82
      %p84 = scmp.ne.s32.totalorder %s72, %s73
      %p85 = scmp.eq.s32.totalorder %s21, 1
      %p86 = por %p84, %p85
      %p88 = scmp.ne.s32.totalorder %s73, %s87
      %p89 = scmp.eq.s32.totalorder %s21, 0
      %p90 = por %p88, %p89
      %s92 = sadd.s32 %s91, 1
      %p95 = scmp.eq.s32.totalorder %s15, 1
      %p96 = scmp.ne.s32.totalorder %s91, %s93
      %p97 = scmp.eq.s32.totalorder %s15, 0
      %p98 = por %p96, %p97
      %p99 = scmp.ne.s32.totalorder %s91, %s93
      %p100 = scmp.eq.s32.totalorder %s20, 1
      %p101 = por %p99, %p100
      %p102 = scmp.ne.s32.totalorder %s93, %s94
      %p103 = scmp.eq.s32.totalorder %s20, 0
      %p104 = por %p102, %p103
      %p105 = scmp.ne.s32.totalorder %s93, %s94
      %p106 = scmp.eq.s32.totalorder %s21, 1
      %p107 = por %p105, %p106
      %p109 = scmp.ne.s32.totalorder %s94, %s108
      %p110 = scmp.eq.s32.totalorder %s21, 0
      %p111 = por %p109, %p110
      %s113 = sadd.s32 %s112, 1
      %p116 = scmp.eq.s32.totalorder %s15, 1
      %p117 = scmp.ne.s32.totalorder %s112, %s114
      %p118 = scmp.eq.s32.totalorder %s15, 0
      %p119 = por %p117, %p118
      %p120 = scmp.ne.s32.totalorder %s112, %s114
      %p121 = scmp.eq.s32.totalorder %s20, 1
      %p122 = por %p120, %p121
      %p123 = scmp.ne.s32.totalorder %s114, %s115
      %p124 = scmp.eq.s32.totalorder %s20, 0
      %p125 = por %p123, %p124
      %p126 = scmp.ne.s32.totalorder %s114, %s115
      %p127 = scmp.eq.s32.totalorder %s21, 1
      %p128 = por %p126, %p127
      %p130 = scmp.ne.s32.totalorder %s115, %s129
      %p131 = scmp.eq.s32.totalorder %s21, 0
      %p132 = por %p130, %p131
      %s134 = sadd.s32 %s133, 1
      %p137 = scmp.eq.s32.totalorder %s15, 1
      %p138 = scmp.ne.s32.totalorder %s133, %s135
      %p139 = scmp.eq.s32.totalorder %s15, 0
      %p140 = por %p138, %p139
      %p141 = scmp.ne.s32.totalorder %s133, %s135
      %p142 = scmp.eq.s32.totalorder %s20, 1
      %p143 = por %p141, %p142
      %p144 = scmp.ne.s32.totalorder %s135, %s136
      %p145 = scmp.eq.s32.totalorder %s20, 0
      %p146 = por %p144, %p145
      %p147 = scmp.ne.s32.totalorder %s135, %s136
      %p148 = scmp.eq.s32.totalorder %s21, 1
      %p149 = por %p147, %p148
      %p151 = scmp.ne.s32.totalorder %s136, %s150
      %p152 = scmp.eq.s32.totalorder %s21, 0
      %p153 = por %p151, %p152
      %s154 = ssub.s32 %s15, %s22
      %p155 = scmp.eq.s32.totalorder %s154, 0
      %s157 = sadd.s32 %s156, 1
      %s158 = scalar_select %p155, %s156, %s157
      %p161 = pneg %p155
      %p162 = scmp.eq.s32.totalorder %s15, 1
      %p163 = por %p161, %p162
      %p164 = scmp.ne.s32.totalorder %s156, %s159
      %p165 = scmp.eq.s32.totalorder %s15, 0
      %p166 = por %p164, %p165
      %p167 = scmp.ne.s32.totalorder %s156, %s159
      %p168 = scmp.eq.s32.totalorder %s20, 1
      %p169 = por %p167, %p168
      %p170 = scmp.ne.s32.totalorder %s159, %s160
      %p171 = scmp.eq.s32.totalorder %s20, 0
      %p172 = por %p170, %p171
      %p173 = scmp.ne.s32.totalorder %s159, %s160
      %p174 = scmp.eq.s32.totalorder %s21, 1
      %p175 = por %p173, %p174
      %p177 = scmp.ne.s32.totalorder %s160, %s176
      %p178 = scmp.eq.s32.totalorder %s21, 0
      %p179 = por %p177, %p178
      %p180 = scmp.le.s32.totalorder 1, %s15
      %p181 = scmp.lt.s32.totalorder %s15, 3
      %p182 = pnand %p180, %p181
      %p183 = pneg %p182
      // Predicated region
      $region9: #{tpu_custom_call.1} parent=5 // pred_check
        _
      $region10: #{tpu_custom_call.1} parent=5 // pred_check_branch
        %185 = sbr.rel (%p182) target = $region12
      $region11: #{tpu_custom_call.1} parent=5 // pred_region
        %s186 = ssub.s32 %s15, 1
        // Predicated region
        $region13: #{tpu_custom_call.1} parent=11 // pred_check
          %p187 = pneg %p62
        $region14: #{tpu_custom_call.1} parent=11 // pred_check_branch
          %189 = sbr.rel (%p187) target = $region16
        $region15: #{tpu_custom_call.1} parent=11 // pred_region
          _
        $region16: #{tpu_custom_call.1} parent=11 // pred_fallthru
          _
        // Predicated region
        $region17: #{tpu_custom_call.1} parent=11 // pred_check
          %p190 = pneg %p83
        $region18: #{tpu_custom_call.1} parent=11 // pred_check_branch
          %192 = sbr.rel (%p190) target = $region20
        $region19: #{tpu_custom_call.1} parent=11 // pred_region
          _
        $region20: #{tpu_custom_call.1} parent=11 // pred_fallthru
          _
        // Predicated region
        $region21: #{tpu_custom_call.1} parent=11 // pred_check
          %p193 = pneg %p104
        $region22: #{tpu_custom_call.1} parent=11 // pred_check_branch
          %195 = sbr.rel (%p193) target = $region24
        $region23: #{tpu_custom_call.1} parent=11 // pred_region
          _
        $region24: #{tpu_custom_call.1} parent=11 // pred_fallthru
          _
        // Predicated region
        $region25: #{tpu_custom_call.1} parent=11 // pred_check
          %p196 = pneg %p125
        $region26: #{tpu_custom_call.1} parent=11 // pred_check_branch
          %198 = sbr.rel (%p196) target = $region28
        $region27: #{tpu_custom_call.1} parent=11 // pred_region
          _
        $region28: #{tpu_custom_call.1} parent=11 // pred_fallthru
          _
        // Predicated region
        $region29: #{tpu_custom_call.1} parent=11 // pred_check
          %p199 = pneg %p146
        $region30: #{tpu_custom_call.1} parent=11 // pred_check_branch
          %201 = sbr.rel (%p199) target = $region32
        $region31: #{tpu_custom_call.1} parent=11 // pred_region
          _
        $region32: #{tpu_custom_call.1} parent=11 // pred_fallthru
          _
      $region12: #{tpu_custom_call.1} parent=5 // pred_fallthru
        _
      %p202 = scmp.lt.s32.totalorder %s15, 2
      // Predicated region
      $region33: #{tpu_custom_call.1} parent=5 // pred_check
        %p203 = pneg %p202
      $region34: #{tpu_custom_call.1} parent=5 // pred_check_branch
        %205 = sbr.rel (%p203) target = $region36
      $region35: #{tpu_custom_call.1} parent=5 // pred_region
        // Predicated region
        $region37: #{tpu_custom_call.1} parent=35 // pred_check
          %p206 = pneg %p35
        $region38: #{tpu_custom_call.1} parent=35 // pred_check_branch
          %208 = sbr.rel (%p206) target = $region40
        $region39: #{tpu_custom_call.1} parent=35 // pred_region
          %p209 = scmp.lt.s32.totalorder %s15, 1
          %s210 = scalar_select %p209, %s15, 1
          %s211 = smul.addr %s210, 4
          %s212 = scalar_lea.vmem %s0, %s211
        $region40: #{tpu_custom_call.1} parent=35 // pred_fallthru
          _
      $region36: #{tpu_custom_call.1} parent=5 // pred_fallthru
        _
      %p213 = scmp.le.s32.totalorder 1, %s15
      %p214 = scmp.lt.s32.totalorder %s15, 3
      %p215 = pnand %p213, %p214
      %p216 = pneg %p215
      // Predicated region
      $region41: #{tpu_custom_call.1} parent=5 // pred_check
        _
      $region42: #{tpu_custom_call.1} parent=5 // pred_check_branch
        %218 = sbr.rel (%p215) target = $region44
      $region43: #{tpu_custom_call.1} parent=5 // pred_region
        %s219 = ssub.s32 %s15, 1
        %p220 = scmp.lt.s32.totalorder %s20, 1
        %s221 = scalar_select %p220, %s20, 1
        %s222 = smul.addr %s221, 4
        %s223 = scalar_lea.vmem %s0, %s222
        %p224 = pneg %p41
        %p225 = pneg %p38
        %p226 = pneg %p62
        %p227 = pneg %p59
        %p228 = pneg %p83
        %p229 = pneg %p80
        %p230 = pneg %p104
        %p231 = pneg %p101
        %p232 = pneg %p125
        %p233 = pneg %p122
        %p234 = pneg %p146
        %p235 = pneg %p143
        %p236 = pneg %p172
        %p237 = pneg %p169
        %s238 = sand.u32 %s159, 1
        %s239 = scalar_lea.sflag [#allocation4], %s238
        %s240 = sand.u32 %s159, 1
        %s241 = smul.addr %s240, 16
        %s242 = scalar_lea.vmem [#allocation3], %s241
        %p243 = scmp.lt.s32.totalorder %s20, 1
        %s244 = scalar_select %p243, %s20, 1
        %s245 = smul.addr %s244, 4
        %s246 = scalar_lea.vmem %s0, %s245
        %v247 = vld [vmem:[%s246] sm:$0xf]
        %vm248 = vcmask 125952
        %249 = vst.msk [vmem:[#allocation2] sm:$0xf] %vm248, %v247
        %251 = vrot.lane.b32.xlu0 %v247, 127
        %v252 = vpop.permute.xlu0 %251
        %254 = vst.msk [vmem:[#allocation2 + $0x4] sm:$0xf] %vm248, %v252
        %255 = vrot.lane.b32.xlu0 %v247, 126
        %v256 = vpop.permute.xlu0 %255
        %258 = vst.msk [vmem:[#allocation2 + $0x8] sm:$0xf] %vm248, %v256
        %v259 = vld [vmem:[%s1] sm:$0xff]
        %v260 = vld [vmem:[%s1 + $0x8] sm:$0xff]
        %v261 = vld [vmem:[#allocation2] sm:$0xff]
        %v262 = vld [vmem:[#allocation2 + $0x8] sm:$0xf]
        %v263 = vld [vmem:[%s2] sm:$0xff]
        %v264 = vld [vmem:[%s2 + $0x8] sm:$0xff]
        %266 = vset.pattern.permute.xlu0 0
        %267 = vperm.xlu0 %266, %v263
        %v268 = vpop.permute.xlu0 %267
        %271 = vset.pattern.permute.xlu0 0
        %272 = vperm.xlu0 %271, %v264
        %v273 = vpop.permute.xlu0 %272
        %vm275 = vcmask 97280
        %v277 = vsel %vm275, %v259, 0
        %v280 = vsel %vm275, %v260, 0
        %vm282 = vcmask 1043456
        %v284 = vsel %vm282, %v262, 0
        %286 = vmatprep.subr.mxu0 0.0
        %287 = vmatpush1.msra.mxu0 0.0
        %288 = vmatprep.subr.mxu0 0.0
        %289 = vmatpush1.msra.mxu0 0.0
        %290 = vmatprep.subr.mxu0 0.0
        %291 = vmatpush1.msra.mxu0 0.0
        %292 = vmatprep.subr.mxu0 0.0
        %293 = vmatpush1.msra.mxu0 0.0
        %294 = vmatprep.subr.mxu0 0.0
        %295 = vmatpush1.msra.mxu0 0.0
        %296 = vmatprep.subr.mxu0 0.0
        %297 = vmatpush1.msra.mxu0 0.0
        %298 = vmatprep.subr.mxu0 0.0
        %299 = vmatpush1.msra.mxu0 0.0
        %300 = vmatprep.subr.mxu0 0.0
        %301 = vmatpush1.msra.mxu0 0.0
        %302 = vmatprep.subr.mxu0 0.0
        %303 = vmatpush1.msra.mxu0 0.0
        %304 = vmatprep.subr.mxu0 0.0
        %305 = vmatpush1.msra.mxu0 0.0
        %306 = vmatprep.subr.mxu0 0.0
        %307 = vmatpush1.msra.mxu0 0.0
        %308 = vmatprep.subr.mxu0 0.0
        %309 = vmatpush1.msra.mxu0 0.0
        %310 = vmatprep.subr.mxu0 0.0
        %311 = vmatpush1.msra.mxu0 0.0
        %312 = vmatprep.subr.mxu0 0.0
        %313 = vmatpush1.msra.mxu0 0.0
        %314 = vmatprep.subr.mxu0 0.0
        %315 = vmatpush1.msra.mxu0 %v284
        %316 = vmatprep.subr.mxu0 0.0
        %317 = vmatpush1.msra.mxu0 %v261
        %318 = vmatprep.subr.mxu0 0.0
        %319 = vmatpush2.msra.mxu0 0.0
        %320 = vmatprep.subr.mxu0 0.0
        %321 = vmatpush2.msra.mxu0 0.0
        %322 = vmatprep.subr.mxu0 0.0
        %323 = vmatpush2.msra.mxu0 0.0
        %324 = vmatprep.subr.mxu0 0.0
        %325 = vmatpush2.msra.mxu0 0.0
        %326 = vmatprep.subr.mxu0 0.0
        %327 = vmatpush2.msra.mxu0 0.0
        %328 = vmatprep.subr.mxu0 0.0
        %329 = vmatpush2.msra.mxu0 0.0
        %330 = vmatprep.subr.mxu0 0.0
        %331 = vmatpush2.msra.mxu0 0.0
        %332 = vmatprep.subr.mxu0 0.0
        %333 = vmatpush2.msra.mxu0 0.0
        %334 = vmatprep.subr.mxu0 0.0
        %335 = vmatpush2.msra.mxu0 0.0
        %336 = vmatprep.subr.mxu0 0.0
        %337 = vmatpush2.msra.mxu0 0.0
        %338 = vmatprep.subr.mxu0 0.0
        %339 = vmatpush2.msra.mxu0 0.0
        %340 = vmatprep.subr.mxu0 0.0
        %341 = vmatpush2.msra.mxu0 0.0
        %342 = vmatprep.subr.mxu0 0.0
        %343 = vmatpush2.msra.mxu0 0.0
        %344 = vmatprep.subr.mxu0 0.0
        %345 = vmatpush2.msra.mxu0 0.0
        %346 = vmatprep.subr.mxu0 0.0
        %347 = vmatpush2.msra.mxu0 0.0
        %348 = vmatprep.subr.mxu0 0.0
        %349 = vmatpush2.msra.mxu0 0.0
        %350 = vmatprep.mubr.f32.mxu0 0.0
        %351 = vmatmul.mubr.f32.gmra.mxu0 %v277
        %v352 = vpop.f32.mrf.mxu0
        %v353 = vadd.f32 %v268, %v352
        %v354 = vpop.f32.mrf.mxu0
        %355 = vmatprep.mubr.f32.mxu0 0.0
        %356 = vmatmul.mubr.f32.gmra.mxu0 %v280
        %v357 = vpop.f32.mrf.mxu0
        %v358 = vadd.f32 %v273, %v357
        %v359 = vpop.f32.mrf.mxu0
        %360 = vdwg.mxu0
        %vm361 = vcmask 130048
        %v362 = vsel %vm361, %v353, 0.0
        %363 = vadd.xlane.f32.xlu0 %v362
        %v364 = vpop.xlane.xlu0 %363
        %v365 = vsel %vm361, %v358, 0.0
        %366 = vadd.xlane.f32.xlu0 %v365
        %v367 = vpop.xlane.xlu0 %366
        %v368 = vmul.f32 %v353, %v353
        %v369 = vmul.f32 %v358, %v358
        %v370 = vsel %vm361, %v368, 0.0
        %371 = vadd.xlane.f32.xlu0 %v370
        %v372 = vpop.xlane.xlu0 %371
        %v373 = vsel %vm361, %v369, 0.0
        %374 = vadd.xlane.f32.xlu0 %v373
        %v375 = vpop.xlane.xlu0 %374
        %v376 = vld [vmem:[%s5] sm:$0xff]
        %v377 = vld [vmem:[%s5 + $0x8] sm:$0xff]
        %v379 = vsel %vm361, %v376, 0
        %v382 = vsel %vm361, %v377, 0
        %384 = vmatprep.subr.mxu0 0.0
        %385 = vmatpush1.msra.mxu0 0.0
        %386 = vmatprep.subr.mxu0 0.0
        %387 = vmatpush1.msra.mxu0 0.0
        %388 = vmatprep.subr.mxu0 0.0
        %389 = vmatpush1.msra.mxu0 0.0
        %390 = vmatprep.subr.mxu0 0.0
        %391 = vmatpush1.msra.mxu0 0.0
        %392 = vmatprep.subr.mxu0 0.0
        %393 = vmatpush1.msra.mxu0 0.0
        %394 = vmatprep.subr.mxu0 0.0
        %395 = vmatpush1.msra.mxu0 0.0
        %396 = vmatprep.subr.mxu0 0.0
        %397 = vmatpush1.msra.mxu0 0.0
        %398 = vmatprep.subr.mxu0 0.0
        %399 = vmatpush1.msra.mxu0 0.0
        %400 = vmatprep.subr.mxu0 0.0
        %401 = vmatpush1.msra.mxu0 0.0
        %402 = vmatprep.subr.mxu0 0.0
        %403 = vmatpush1.msra.mxu0 0.0
        %404 = vmatprep.subr.mxu0 0.0
        %405 = vmatpush1.msra.mxu0 0.0
        %406 = vmatprep.subr.mxu0 0.0
        %407 = vmatpush1.msra.mxu0 0.0
        %408 = vmatprep.subr.mxu0 0.0
        %409 = vmatpush1.msra.mxu0 0.0
        %410 = vmatprep.subr.mxu0 0.0
        %411 = vmatpush1.msra.mxu0 0.0
        %412 = vmatprep.subr.mxu0 0.0
        %413 = vmatpush1.msra.mxu0 %v367
        %414 = vmatprep.subr.mxu0 0.0
        %415 = vmatpush1.msra.mxu0 %v364
        %416 = vmatprep.subr.mxu0 0.0
        %417 = vmatpush2.msra.mxu0 0.0
        %418 = vmatprep.subr.mxu0 0.0
        %419 = vmatpush2.msra.mxu0 0.0
        %420 = vmatprep.subr.mxu0 0.0
        %421 = vmatpush2.msra.mxu0 0.0
        %422 = vmatprep.subr.mxu0 0.0
        %423 = vmatpush2.msra.mxu0 0.0
        %424 = vmatprep.subr.mxu0 0.0
        %425 = vmatpush2.msra.mxu0 0.0
        %426 = vmatprep.subr.mxu0 0.0
        %427 = vmatpush2.msra.mxu0 0.0
        %428 = vmatprep.subr.mxu0 0.0
        %429 = vmatpush2.msra.mxu0 0.0
        %430 = vmatprep.subr.mxu0 0.0
        %431 = vmatpush2.msra.mxu0 0.0
        %432 = vmatprep.subr.mxu0 0.0
        %433 = vmatpush2.msra.mxu0 0.0
        %434 = vmatprep.subr.mxu0 0.0
        %435 = vmatpush2.msra.mxu0 0.0
        %436 = vmatprep.subr.mxu0 0.0
        %437 = vmatpush2.msra.mxu0 0.0
        %438 = vmatprep.subr.mxu0 0.0
        %439 = vmatpush2.msra.mxu0 0.0
        %440 = vmatprep.subr.mxu0 0.0
        %441 = vmatpush2.msra.mxu0 0.0
        %442 = vmatprep.subr.mxu0 0.0
        %443 = vmatpush2.msra.mxu0 0.0
        %444 = vmatprep.subr.mxu0 0.0
        %445 = vmatpush2.msra.mxu0 0.0
        %446 = vmatprep.subr.mxu0 0.0
        %447 = vmatpush2.msra.mxu0 0.0
        %448 = vmatprep.mubr.f32.mxu0 0.0
        %449 = vmatmul.mubr.f32.gmra.mxu0 %v379
        %v450 = vpop.f32.mrf.mxu0
        %v451 = vadd.f32 0.0, %v450
        %v452 = vpop.f32.mrf.mxu0
        %453 = vmatprep.mubr.f32.mxu0 0.0
        %454 = vmatmul.mubr.f32.gmra.mxu0 %v382
        %v455 = vpop.f32.mrf.mxu0
        %v456 = vadd.f32 0.0, %v455
        %v457 = vpop.f32.mrf.mxu0
        %458 = vdwg.mxu0
        %459 = vmatprep.subr.mxu0 0.0
        %460 = vmatpush1.msra.mxu0 0.0
        %461 = vmatprep.subr.mxu0 0.0
        %462 = vmatpush1.msra.mxu0 0.0
        %463 = vmatprep.subr.mxu0 0.0
        %464 = vmatpush1.msra.mxu0 0.0
        %465 = vmatprep.subr.mxu0 0.0
        %466 = vmatpush1.msra.mxu0 0.0
        %467 = vmatprep.subr.mxu0 0.0
        %468 = vmatpush1.msra.mxu0 0.0
        %469 = vmatprep.subr.mxu0 0.0
        %470 = vmatpush1.msra.mxu0 0.0
        %471 = vmatprep.subr.mxu0 0.0
        %472 = vmatpush1.msra.mxu0 0.0
        %473 = vmatprep.subr.mxu0 0.0
        %474 = vmatpush1.msra.mxu0 0.0
        %475 = vmatprep.subr.mxu0 0.0
        %476 = vmatpush1.msra.mxu0 0.0
        %477 = vmatprep.subr.mxu0 0.0
        %478 = vmatpush1.msra.mxu0 0.0
        %479 = vmatprep.subr.mxu0 0.0
        %480 = vmatpush1.msra.mxu0 0.0
        %481 = vmatprep.subr.mxu0 0.0
        %482 = vmatpush1.msra.mxu0 0.0
        %483 = vmatprep.subr.mxu0 0.0
        %484 = vmatpush1.msra.mxu0 0.0
        %485 = vmatprep.subr.mxu0 0.0
        %486 = vmatpush1.msra.mxu0 0.0
        %487 = vmatprep.subr.mxu0 0.0
        %488 = vmatpush1.msra.mxu0 %v375
        %489 = vmatprep.subr.mxu0 0.0
        %490 = vmatpush1.msra.mxu0 %v372
        %491 = vmatprep.subr.mxu0 0.0
        %492 = vmatpush2.msra.mxu0 0.0
        %493 = vmatprep.subr.mxu0 0.0
        %494 = vmatpush2.msra.mxu0 0.0
        %495 = vmatprep.subr.mxu0 0.0
        %496 = vmatpush2.msra.mxu0 0.0
        %497 = vmatprep.subr.mxu0 0.0
        %498 = vmatpush2.msra.mxu0 0.0
        %499 = vmatprep.subr.mxu0 0.0
        %500 = vmatpush2.msra.mxu0 0.0
        %501 = vmatprep.subr.mxu0 0.0
        %502 = vmatpush2.msra.mxu0 0.0
        %503 = vmatprep.subr.mxu0 0.0
        %504 = vmatpush2.msra.mxu0 0.0
        %505 = vmatprep.subr.mxu0 0.0
        %506 = vmatpush2.msra.mxu0 0.0
        %507 = vmatprep.subr.mxu0 0.0
        %508 = vmatpush2.msra.mxu0 0.0
        %509 = vmatprep.subr.mxu0 0.0
        %510 = vmatpush2.msra.mxu0 0.0
        %511 = vmatprep.subr.mxu0 0.0
        %512 = vmatpush2.msra.mxu0 0.0
        %513 = vmatprep.subr.mxu0 0.0
        %514 = vmatpush2.msra.mxu0 0.0
        %515 = vmatprep.subr.mxu0 0.0
        %516 = vmatpush2.msra.mxu0 0.0
        %517 = vmatprep.subr.mxu0 0.0
        %518 = vmatpush2.msra.mxu0 0.0
        %519 = vmatprep.subr.mxu0 0.0
        %520 = vmatpush2.msra.mxu0 0.0
        %521 = vmatprep.subr.mxu0 0.0
        %522 = vmatpush2.msra.mxu0 0.0
        %523 = vmatprep.mubr.f32.mxu0 0.0
        %524 = vmatmul.mubr.f32.gmra.mxu0 %v379
        %v525 = vpop.f32.mrf.mxu0
        %v526 = vadd.f32 0.0, %v525
        %v527 = vpop.f32.mrf.mxu0
        %528 = vmatprep.mubr.f32.mxu0 0.0
        %529 = vmatmul.mubr.f32.gmra.mxu0 %v382
        %v530 = vpop.f32.mrf.mxu0
        %v531 = vadd.f32 0.0, %v530
        %v532 = vpop.f32.mrf.mxu0
        %533 = vdwg.mxu0
        %v534 = vmul.f32 %v451, %v451
        %v535 = vmul.f32 %v456, %v456
        %v536 = vsub.f32 %v526, %v534
        %v537 = vsub.f32 %v531, %v535
        %v538 = vadd.f32 %v536, 1e-05
        %v539 = vadd.f32 %v537, 1e-05
        %v540 = vrsqrt.pop %v538
        %v541 = vrsqrt.pop %v539
        %v542 = vld [vmem:[%s3] sm:$0xff]
        %v543 = vld [vmem:[%s3 + $0x8] sm:$0xff]
        %v544 = vmul.f32 %v542, %v540
        %v545 = vmul.f32 %v543, %v541
        %v546 = vld [vmem:[%s4] sm:$0xff]
        %v547 = vld [vmem:[%s4 + $0x8] sm:$0xff]
        %v548 = vmul.f32 %v451, %v544
        %v549 = vmul.f32 %v456, %v545
        %v550 = vsub.f32 %v546, %v548
        %v551 = vsub.f32 %v547, %v549
        %553 = vset.pattern.permute.xlu0 0
        %554 = vperm.xlu0 %553, %v544
        %v555 = vpop.permute.xlu0 %554
        %558 = vset.pattern.permute.xlu0 0
        %559 = vperm.xlu0 %558, %v545
        %v560 = vpop.permute.xlu0 %559
        %v562 = vmul.f32 %v353, %v555
        %v563 = vmul.f32 %v358, %v560
        %565 = vset.pattern.permute.xlu0 0
        %566 = vperm.xlu0 %565, %v550
        %v567 = vpop.permute.xlu0 %566
        %570 = vset.pattern.permute.xlu0 0
        %571 = vperm.xlu0 %570, %v551
        %v572 = vpop.permute.xlu0 %571
        %v574 = vadd.f32 %v562, %v567
        %v575 = vadd.f32 %v563, %v572
        %v576 = vmin.f32 %v574, 20.0
        %v577 = vmin.f32 %v575, 20.0
        %v578 = vmul.f32 %v576, 1.442695
        %v579 = vpow.pop %v578
        %v580 = vmul.f32 %v577, 1.442695
        %v581 = vpow.pop %v580
        %v582 = vadd.f32 %v579, 2.0
        %v583 = vadd.f32 %v581, 2.0
        %v584 = vmul.f32 %v579, %v582
        %v585 = vmul.f32 %v581, %v583
        %v586 = vadd.f32 %v584, 2.0
        %v587 = vadd.f32 %v585, 2.0
        %v588 = vrcp.pop %v586
        %v589 = vrcp.pop %v587
        %v590 = vmul.f32 %v586, %v588
        %v591 = vmul.f32 %v587, %v589
        %v592 = vsub.f32 2.0, %v590
        %v593 = vsub.f32 2.0, %v591
        %v594 = vmul.f32 %v588, %v592
        %v595 = vmul.f32 %v589, %v593
        %v596 = vmul.f32 %v574, %v584
        %v597 = vmul.f32 %v575, %v585
        %v598 = vmul.f32 %v596, %v594
        %v599 = vmul.f32 %v597, %v595
        %600 = vst.msk [vmem:[%s242] sm:$0xff] %vm361, %v598
        %601 = vst.msk [vmem:[%s242 + $0x8] sm:$0xff] %vm361, %v599
        %s602 = sand.u32 %s159, 1
        %s603 = scalar_lea.sflag [#allocation4], %s602
        %s604 = sand.u32 %s159, 1
        %s605 = smul.addr %s604, 16
        %s606 = scalar_lea.vmem [#allocation3], %s605
        // Predicated region
        $region45: #{tpu_custom_call.1} parent=43 // pred_check
          %p607 = pneg %p169
        $region46: #{tpu_custom_call.1} parent=43 // pred_check_branch
          %609 = sbr.rel (%p607) target = $region48
        $region47: #{tpu_custom_call.1} parent=43 // pred_region
          %s611 = ssub.s32 256, 256
          %612 = vsyncadd %s603, %s611
          %s613 = smul.addr %s20, 2
          %s614 = smul.addr %s613, 128
          %s615 = scalar_lea.hbm %s6, %s614
          %s616 = sshll.u32 %s606, 4
          %s617 = int_to_ptr.vmem [resolvable:$true] %s616
          %622 = dma.vmem_to_hbm [thread:$0]  %s617, 256, %s615, %s603, 128, 128, 8
        $region48: #{tpu_custom_call.1} parent=43 // pred_fallthru
          _
      $region44: #{tpu_custom_call.1} parent=5 // pred_fallthru
        _
      %p623 = scmp.le.s32.totalorder 2, %s15
      // Predicated region
      $region49: #{tpu_custom_call.1} parent=5 // pred_check
        %p624 = pneg %p623
      $region50: #{tpu_custom_call.1} parent=5 // pred_check_branch
        %626 = sbr.rel (%p624) target = $region52
      $region51: #{tpu_custom_call.1} parent=5 // pred_region
        %s627 = ssub.s32 %s15, 2
        // Predicated region
        $region53: #{tpu_custom_call.1} parent=51 // pred_check
          %p628 = pneg %p175
        $region54: #{tpu_custom_call.1} parent=51 // pred_check_branch
          %630 = sbr.rel (%p628) target = $region56
        $region55: #{tpu_custom_call.1} parent=51 // pred_region
          %s631 = sand.u32 %s160, 1
          %s632 = scalar_lea.sflag [#allocation4], %s631
          %s633 = sand.u32 %s160, 1
          %s634 = smul.addr %s633, 16
          %s635 = scalar_lea.vmem [#allocation3], %s634
          %636 = dma.done %s632, 256
        $region56: #{tpu_custom_call.1} parent=51 // pred_fallthru
          _
      $region52: #{tpu_custom_call.1} parent=5 // pred_fallthru
        _
    $region6: #{tpu_custom_call.1} parent=1 // loop_footer
      %s19 = sadd.s32 1, %s15
    $region7: #{tpu_custom_call.1} parent=1 // loop_footer_branch
      %14 = sbr.rel target = $region3
    $region8: #{tpu_custom_call.1} parent=1 // loop_exit
      _
    %637 = vsyncpa [#allocation4], 1
    %s638 = scalar_lea.sflag [#allocation4], 1
    %639 = vsyncpa %s638, 1

</llo_original>
